<compile_context>
chip_gen: v5e
topology: v5e:2x2
jax: 0.10.0
libtpu: 0.0.40
codegen_flags: <defaults>
</compile_context>

<pallas_src>
import functools

import jax
import jax.numpy as jnp
from jax.experimental import pallas as pl
from jax.experimental.pallas import tpu as pltpu

_MIB = 1024 * 1024


def _round_up(v, m):
    return ((v + m - 1) // m) * m


def _pick_tile(n):
    n128 = _round_up(max(n, 1), 128)
    if n128 <= 512:
        return n128            # whole (small) graph in one row tile
    if n128 >= 8192:
        return 1024            # big graphs: 2 MiB int8 A' blocks
    return 512                 # keeps >= 2 row tiles for v7x megacore


# ---------------------------------------------------------------------------
# One GINConv layer:
#   out = relu( relu( (A @ h + (1+eps) h) @ W1 + b1 ) @ W2 + b2 )
# Grid = (row tiles, K tiles); A' streamed as int8 (tile x tile) blocks, h
# resident in VMEM (or streamed as K-tiles), f32 accumulator scratch, fused
# MLP epilogue on the last K step.  The extra .relu() in GIN.forward is
# idempotent (MLP already ends in ReLU) and is dropped.
# ---------------------------------------------------------------------------
def gin_layer_kernel(a_ref, h_ref, w1_ref, b1_ref, w2_ref, b2_ref,
                     out_ref, acc_ref, *, tile, resident_h):
    i = pl.program_id(0)
    k = pl.program_id(1)

    @pl.when(k == 0)
    def _():
        acc_ref[...] = jnp.zeros_like(acc_ref)

    if resident_h:
        start = pl.multiple_of(k * tile, tile)
        h_tile = h_ref[pl.ds(start, tile), :]
    else:
        h_tile = h_ref[...]

    # int8 A' tile -> bf16 on the VPU just before the MXU (exact for integer
    # edge multiplicities up to 127); accumulate in f32.
    a_tile = a_ref[...].astype(jnp.float32).astype(jnp.bfloat16)
    acc_ref[...] += jnp.dot(a_tile, h_tile, preferred_element_type=jnp.float32)

    # GIN self term (1 + eps) * h_i, eps = 0: only diagonal blocks contribute,
    # so A + I never has to be materialized on the host.
    @pl.when(i == k)
    def _():
        acc_ref[...] += h_tile.astype(jnp.float32)

    @pl.when(k == pl.num_programs(1) - 1)
    def _():
        agg = acc_ref[...].astype(jnp.bfloat16)
        z = jnp.dot(agg, w1_ref[...], preferred_element_type=jnp.float32) + b1_ref[...]
        z = jnp.maximum(z, 0.0).astype(jnp.bfloat16)
        z = jnp.dot(z, w2_ref[...], preferred_element_type=jnp.float32) + b2_ref[...]
        out_ref[...] = jnp.maximum(z, 0.0).astype(out_ref.dtype)


def gin_layer(a_i8, h, w1, b1, w2, b2, *, tile, resident_h):
    n_pad = a_i8.shape[0]
    f_in = h.shape[1]
    f_out = w1.shape[1]
    grid = (n_pad // tile, n_pad // tile)

    if resident_h:
        h_spec = pl.BlockSpec((n_pad, f_in), lambda i, k: (0, 0))   # VMEM resident
    else:
        h_spec = pl.BlockSpec((tile, f_in), lambda i, k: (k, 0))    # streamed K-tile

    flops = (2 * n_pad * n_pad * f_in          # aggregation
             + 2 * n_pad * f_in * f_out        # MLP linear 1
             + 2 * n_pad * f_out * f_out)      # MLP linear 2
    h_reads = 1 if resident_h else grid[0]
    bytes_accessed = (n_pad * n_pad                              # A' (int8)
                      + n_pad * f_in * 2 * h_reads               # h
                      + (w1.size + w2.size) * 2 + (b1.size + b2.size) * 4
                      + n_pad * f_out * 2)                       # output h

    vmem_bytes = (2 * tile * tile                                            # A' (int8, 2-buf)
                  + (2 * n_pad * f_in * 2 if resident_h else 2 * tile * f_in * 2)
                  + 2 * (w1.size + w2.size) * 2 + 2 * (b1.size + b2.size) * 4
                  + 2 * tile * f_out * 2                                     # out (2-buf)
                  + tile * f_in * 4)                                         # f32 accumulator
    vmem_limit = min(max(int(vmem_bytes * 1.5) + 2 * _MIB, 16 * _MIB), 48 * _MIB)

    kernel = functools.partial(gin_layer_kernel, tile=tile, resident_h=resident_h)
    return pl.pallas_call(
        kernel,
        out_shape=jax.ShapeDtypeStruct((n_pad, f_out), jnp.bfloat16),
        grid_spec=pltpu.PrefetchScalarGridSpec(
            num_scalar_prefetch=0,
            grid=grid,
            in_specs=[
                pl.BlockSpec((tile, tile), lambda i, k: (i, k)),    # A' tile (int8)
                h_spec,                                             # h
                pl.BlockSpec((f_in, f_out), lambda i, k: (0, 0)),   # W1
                pl.BlockSpec((1, f_out), lambda i, k: (0, 0)),      # b1
                pl.BlockSpec((f_out, f_out), lambda i, k: (0, 0)),  # W2
                pl.BlockSpec((1, f_out), lambda i, k: (0, 0)),      # b2
            ],
            out_specs=pl.BlockSpec((tile, f_out), lambda i, k: (i, 0)),
            scratch_shapes=[pltpu.VMEM((tile, f_in), jnp.float32)],
        ),
        compiler_params=pltpu.CompilerParams(
            dimension_semantics=("parallel", "arbitrary"),
            vmem_limit_bytes=vmem_limit,
        ),
        cost_estimate=pl.CostEstimate(flops=flops, transcendentals=0,
                                      bytes_accessed=bytes_accessed),
    )(a_i8, h, w1, b1, w2, b2)


# ---------------------------------------------------------------------------
# global_mean_pool (0/1 indicator matmul streamed over N, 1/count applied in
# f32 in the epilogue) + dropout (identity, training=False) + Linear head.
# ---------------------------------------------------------------------------
def pool_head_kernel(p_ref, h_ref, wl_ref, bl_ref, inv_ref, out_ref, acc_ref):
    k = pl.program_id(0)

    @pl.when(k == 0)
    def _():
        acc_ref[...] = jnp.zeros_like(acc_ref)

    acc_ref[...] += jnp.dot(p_ref[...], h_ref[...],
                            preferred_element_type=jnp.float32)

    @pl.when(k == pl.num_programs(0) - 1)
    def _():
        pooled = acc_ref[...] * inv_ref[...]          # exact mean in f32
        # dropout(p=0.5, training=False) is the identity at inference.
        out_ref[...] = (jnp.dot(pooled, wl_ref[...],
                                preferred_element_type=jnp.float32)
                        + bl_ref[...])


def pool_head(p_ind, h, wl, bl, inv_counts, *, tile):
    g_pad, n_pad = p_ind.shape
    h_dim = h.shape[1]
    c_pad = wl.shape[1]
    grid = (n_pad // tile,)
    vmem_bytes = (2 * g_pad * tile * 2 + 2 * tile * h_dim * 2
                  + 2 * wl.size * 4 + 2 * bl.size * 4 + 2 * g_pad * 4
                  + 2 * g_pad * c_pad * 4 + g_pad * h_dim * 4)
    vmem_limit = min(max(int(vmem_bytes * 1.5) + 2 * _MIB, 16 * _MIB), 48 * _MIB)
    return pl.pallas_call(
        pool_head_kernel,
        out_shape=jax.ShapeDtypeStruct((g_pad, c_pad), jnp.float32),
        grid_spec=pltpu.PrefetchScalarGridSpec(
            num_scalar_prefetch=0,
            grid=grid,
            in_specs=[
                pl.BlockSpec((g_pad, tile), lambda k: (0, k)),   # 0/1 indicator tile
                pl.BlockSpec((tile, h_dim), lambda k: (k, 0)),   # h tile
                pl.BlockSpec((h_dim, c_pad), lambda k: (0, 0)),  # Wl
                pl.BlockSpec((1, c_pad), lambda k: (0, 0)),      # bl
                pl.BlockSpec((g_pad, 1), lambda k: (0, 0)),      # 1/count (f32)
            ],
            out_specs=pl.BlockSpec((g_pad, c_pad), lambda k: (0, 0)),
            scratch_shapes=[pltpu.VMEM((g_pad, h_dim), jnp.float32)],
        ),
        compiler_params=pltpu.CompilerParams(
            dimension_semantics=("arbitrary",),
            vmem_limit_bytes=vmem_limit,
        ),
    )(p_ind, h, wl, bl, inv_counts)


# ---------------------------------------------------------------------------
# Full forward: pad to lane/tile-dense shapes, run 2 layer kernels + pool/head.
# ---------------------------------------------------------------------------
def gin_forward(x, A, batch, params, *, num_graphs, tile=None, resident_h=None):
    N, F_in = x.shape
    G = num_graphs
    H = params["w10"].shape[1]
    C = params["wl"].shape[1]

    if tile is None:
        tile = _pick_tile(N)
    n_pad = _round_up(N, tile)
    f_pad = _round_up(F_in, 128)
    h_pad = _round_up(H, 128)
    c_pad = _round_up(C, 128)
    g_pad = _round_up(G, 8)

    if resident_h is None:
        # Resident-h (counted double-buffered) capped at ~24 MiB so the layer
        # fits comfortably inside v7x's 64 MiB-per-TC VMEM.
        resident_h = 2 * n_pad * max(f_pad, h_pad) * 2 <= 24 * _MIB

    bf16, f32 = jnp.bfloat16, jnp.float32

    # Adjacency stored as int8 (exact for small integer edge multiplicities);
    # the (1+eps) self-loop is folded in inside the kernel on diagonal blocks,
    # so no A + I materialization pass here.
    a_i8 = jnp.zeros((n_pad, n_pad), jnp.int8).at[:N, :N].set(A.astype(jnp.int8))

    x_p = jnp.zeros((n_pad, f_pad), bf16).at[:N, :F_in].set(x.astype(bf16))

    # Mean pool = exact 0/1 indicator (bf16) + f32 1/count scale in epilogue.
    ind = (batch[None, :] == jnp.arange(G, dtype=batch.dtype)[:, None])
    counts = jnp.sum(ind.astype(f32), axis=1)
    inv_counts = jnp.where(counts > 0, 1.0 / jnp.maximum(counts, 1.0), 0.0)
    p_ind = jnp.zeros((g_pad, n_pad), bf16).at[:G, :N].set(ind.astype(bf16))
    inv_p = jnp.zeros((g_pad, 1), f32).at[:G, 0].set(inv_counts)

    def pad_w(w, r, c):
        return jnp.zeros((r, c), bf16).at[:w.shape[0], :w.shape[1]].set(w.astype(bf16))

    def pad_b(b, c):
        return jnp.zeros((1, c), f32).at[:, :b.shape[1]].set(b.astype(f32))

    w10 = pad_w(params["w10"], f_pad, h_pad); b10 = pad_b(params["b10"], h_pad)
    w20 = pad_w(params["w20"], h_pad, h_pad); b20 = pad_b(params["b20"], h_pad)
    w11 = pad_w(params["w11"], h_pad, h_pad); b11 = pad_b(params["b11"], h_pad)
    w21 = pad_w(params["w21"], h_pad, h_pad); b21 = pad_b(params["b21"], h_pad)
    wl = jnp.zeros((h_pad, c_pad), f32).at[:H, :C].set(params["wl"].astype(f32))
    bl = jnp.zeros((1, c_pad), f32).at[:, :C].set(params["bl"].astype(f32))

    # Note: padded node rows of h0/h1 are relu(bias) garbage after the fused
    # MLP epilogue; inert because A' and the pool indicator have zero columns
    # at those indices.
    h0 = gin_layer(a_i8, x_p, w10, b10, w20, b20, tile=tile, resident_h=resident_h)
    h1 = gin_layer(a_i8, h0, w11, b11, w21, b21, tile=tile, resident_h=resident_h)
    # TODO(synk): when n_pad <= tile the two layers + pool/head could be fused
    # into a single pallas_call to save launch overhead on tiny graphs.
    out = pool_head(p_ind, h1, wl, bl, inv_p, tile=tile)
    return out[:G, :C]


# ---------------------------------------------------------------------------
# References, init, glue
# ---------------------------------------------------------------------------
def _linear_init(key, fan_in, fan_out):
    # PyTorch nn.Linear default: U(-1/sqrt(fan_in), 1/sqrt(fan_in)) for W and b.
    kw, kb = jax.random.split(key)
    bound = 1.0 / jnp.sqrt(fan_in)
    w = jax.random.uniform(kw, (fan_in, fan_out), jnp.float32, -bound, bound)
    b = jax.random.uniform(kb, (1, fan_out), jnp.float32, -bound, bound)
    return w, b


def _reference_f32(x, A, batch, num_graphs, p):
    # Exact module semantics in f32 (extra .relu() idempotent, dropout = id).
    h = x
    for w1, b1, w2, b2 in ((p["w10"], p["b10"], p["w20"], p["b20"]),
                           (p["w11"], p["b11"], p["w21"], p["b21"])):
        agg = A @ h + h
        h = jnp.maximum(agg @ w1 + b1, 0.0)
        h = jnp.maximum(h @ w2 + b2, 0.0)
    ind = (batch[None, :] == jnp.arange(num_graphs)[:, None]).astype(jnp.float32)
    pooled = (ind @ h) / jnp.sum(ind, axis=1, keepdims=True)
    return pooled @ p["wl"] + p["bl"]


def _reference_bf16(x, A, batch, num_graphs, p):
    # Mirrors the kernel's mixed precision (bf16 operands, f32 accumulation).
    bf, f32 = jnp.bfloat16, jnp.float32
    a_bf = A.astype(bf)
    h = x.astype(bf)
    for w1, b1, w2, b2 in ((p["w10"], p["b10"], p["w20"], p["b20"]),
                           (p["w11"], p["b11"], p["w21"], p["b21"])):
        agg = jnp.dot(a_bf, h, preferred_element_type=f32) + h.astype(f32)
        z = jnp.maximum(jnp.dot(agg.astype(bf), w1.astype(bf),
                                preferred_element_type=f32) + b1, 0.0).astype(bf)
        h = jnp.maximum(jnp.dot(z, w2.astype(bf),
                                preferred_element_type=f32) + b2, 0.0).astype(bf)
    ind = (batch[None, :] == jnp.arange(num_graphs)[:, None])
    counts = jnp.sum(ind.astype(f32), axis=1, keepdims=True)
    pooled = jnp.dot(ind.astype(bf), h, preferred_element_type=f32) / counts
    return jnp.dot(pooled, p["wl"], preferred_element_type=f32) + p["bl"]


def _make_graph_batch(key, n, f_in, g, e):
    kx, ke = jax.random.split(key)
    x = jax.random.normal(kx, (n, f_in), jnp.float32)
    nodes_per_g = n // g
    ksrc, kdst = jax.random.split(ke)
    graph_of_edge = jnp.repeat(jnp.arange(g, dtype=jnp.int32), e // g)
    n_e = graph_of_edge.shape[0]
    src = jax.random.randint(ksrc, (n_e,), 0, nodes_per_g) + graph_of_edge * nodes_per_g
    dst = jax.random.randint(kdst, (n_e,), 0, nodes_per_g) + graph_of_edge * nodes_per_g
    edge_index = jnp.stack([src, dst])                        # [2, E], like PyG
    batch = jnp.repeat(jnp.arange(g, dtype=jnp.int32), nodes_per_g)
    # Glue (plain JAX): dense adjacency A[i, j] = #edges j -> i.
    A = jnp.zeros((n, n), jnp.float32).at[edge_index[1], edge_index[0]].add(1.0)
    return x, A, batch


if __name__ == "__main__":
    F_IN, H, C = 8, 32, 4

    key = jax.random.PRNGKey(0)
    kg1, kg2, k0a, k0b, k1a, k1b, klin = jax.random.split(key, 7)

    w10, b10 = _linear_init(k0a, F_IN, H)
    w20, b20 = _linear_init(k0b, H, H)
    w11, b11 = _linear_init(k1a, H, H)
    w21, b21 = _linear_init(k1b, H, H)
    wl, bl = _linear_init(klin, H, C)
    params = dict(w10=w10, b10=b10, w20=w20, b20=b20,
                  w11=w11, b11=b11, w21=w21, b21=b21, wl=wl, bl=bl)

    fwd = jax.jit(gin_forward, static_argnames=("num_graphs", "tile", "resident_h"))

    # Case 1: tiny batch (2 graphs x 8 nodes) -> grid (1,1), resident h.
    x1, A1, batch1 = _make_graph_batch(kg1, 16, F_IN, 2, 40)
    out1 = fwd(x1, A1, batch1, params, num_graphs=2)
    jax.block_until_ready(out1)
    assert out1.shape == (2, C)
    assert jnp.allclose(out1, _reference_bf16(x1, A1, batch1, 2, params),
                        atol=2e-2, rtol=2e-2)
    assert jnp.allclose(out1, _reference_f32(x1, A1, batch1, 2, params),
                        atol=1.5e-1, rtol=1.5e-1)

    # Case 2: 3 graphs x 96 nodes, forced tile=128 -> 3x3 grid; exercises the
    # multi-tile K accumulation, in-kernel diagonal self-loop fold, the f32
    # 1/count pooling, and both resident-h and streamed-h paths.
    x2, A2, batch2 = _make_graph_batch(kg2, 288, F_IN, 3, 900)
    ref_bf2 = _reference_bf16(x2, A2, batch2, 3, params)
    ref_f32_2 = _reference_f32(x2, A2, batch2, 3, params)
    for res_h in (True, False):
        out2 = fwd(x2, A2, batch2, params, num_graphs=3, tile=128, resident_h=res_h)
        jax.block_until_ready(out2)
        assert out2.shape == (3, C)
        assert jnp.allclose(out2, ref_bf2, atol=2e-2, rtol=2e-2)
        assert jnp.allclose(out2, ref_f32_2, atol=1.5e-1, rtol=1.5e-1)

    print("KERNEL_OK")
</pallas_src>

<mosaic_0001>
module attributes {stable_mosaic.version = 11 : i64} {
  func.func @gin_layer_kernel(%arg0: i32, %arg1: i32, %arg2: memref<128x128xi8, #tpu.memory_space<vmem>>, %arg3: memref<128x128xbf16, #tpu.memory_space<vmem>>, %arg4: memref<128x128xbf16, #tpu.memory_space<vmem>>, %arg5: memref<1x128xf32, #tpu.memory_space<vmem>>, %arg6: memref<128x128xbf16, #tpu.memory_space<vmem>>, %arg7: memref<1x128xf32, #tpu.memory_space<vmem>>, %arg8: memref<128x128xbf16, #tpu.memory_space<vmem>>, %arg9: memref<128x128xf32, #tpu.memory_space<vmem>>) attributes {dimension_semantics = [#tpu.dimension_semantics<parallel>, #tpu.dimension_semantics<arbitrary>], iteration_bounds = array<i64: 1, 1>, scalar_prefetch = 0 : i64, scratch_operands = 1 : i64, tpu.core_type = #tpu.core_type<tc>, window_params = [{transform_indices = @transform_0, window_bounds = array<i64: 128, 128>}, {pipeline_mode = #tpu.pipeline_mode<synchronous>, transform_indices = @transform_1, window_bounds = array<i64: 128, 128>}, {pipeline_mode = #tpu.pipeline_mode<synchronous>, transform_indices = @transform_2, window_bounds = array<i64: 128, 128>}, {pipeline_mode = #tpu.pipeline_mode<synchronous>, transform_indices = @transform_3, window_bounds = array<i64: 1, 128>}, {pipeline_mode = #tpu.pipeline_mode<synchronous>, transform_indices = @transform_4, window_bounds = array<i64: 128, 128>}, {pipeline_mode = #tpu.pipeline_mode<synchronous>, transform_indices = @transform_5, window_bounds = array<i64: 1, 128>}, {transform_indices = @transform_6, window_bounds = array<i64: 128, 128>}]} {
    %c0_i32 = arith.constant 0 : i32
    %0 = arith.cmpi eq, %arg1, %c0_i32 : i32
    %1 = arith.extui %0 : i1 to i32
    %c0_i32_0 = arith.constant 0 : i32
    %2 = arith.cmpi ne, %1, %c0_i32_0 : i32
    scf.if %2 {
      %cst_10 = arith.constant 0.000000e+00 : f32
      %20 = vector.broadcast %cst_10 : f32 to vector<128x128xf32>
      %c0_11 = arith.constant 0 : index
      %c0_12 = arith.constant 0 : index
      %21 = vector.load %arg9[%c0_11, %c0_12] : memref<128x128xf32, #tpu.memory_space<vmem>>, vector<128x128xf32>
      tpu.vector_store %arg9[%c0_11, %c0_12], %20 {strides = array<i32>} : memref<128x128xf32, #tpu.memory_space<vmem>>, vector<128x128xf32>,
    } else {
    }
    %c128_i32 = arith.constant 128 : i32
    %3 = arith.muli %arg1, %c128_i32 : i32
    %4 = tpu.assume_multiple %3, 128 : i32
    %5 = arith.index_cast %4 : i32 to index
    %c0 = arith.constant 0 : index
    %6 = vector.load %arg3[%5, %c0] : memref<128x128xbf16, #tpu.memory_space<vmem>>, vector<128x128xbf16>
    %c0_1 = arith.constant 0 : index
    %c0_2 = arith.constant 0 : index
    %7 = vector.load %arg2[%c0_1, %c0_2] : memref<128x128xi8, #tpu.memory_space<vmem>>, vector<128x128xi8>
    %8 = arith.sitofp %7 : vector<128x128xi8> to vector<128x128xf32>
    %9 = arith.truncf %8 : vector<128x128xf32> to vector<128x128xbf16>
    %c0_3 = arith.constant 0 : index
    %c0_4 = arith.constant 0 : index
    %10 = vector.load %arg9[%c0_3, %c0_4] : memref<128x128xf32, #tpu.memory_space<vmem>>, vector<128x128xf32>
    %cst = arith.constant dense<0.000000e+00> : vector<128x128xf32>
    %11 = tpu.matmul %9, %6, %cst {dimension_numbers = #tpu.dot_dimension_numbers<[1], [0], [0], [1], [0, 0, 1, 1], [], []>} : vector<128x128xbf16>, vector<128x128xbf16>, vector<128x128xf32> -> vector<128x128xf32>
    %12 = arith.addf %10, %11 : vector<128x128xf32>
    %c0_5 = arith.constant 0 : index
    %c0_6 = arith.constant 0 : index
    %13 = vector.load %arg9[%c0_5, %c0_6] : memref<128x128xf32, #tpu.memory_space<vmem>>, vector<128x128xf32>
    tpu.vector_store %arg9[%c0_5, %c0_6], %12 {strides = array<i32>} : memref<128x128xf32, #tpu.memory_space<vmem>>, vector<128x128xf32>,
    %14 = arith.cmpi eq, %arg0, %arg1 : i32
    %15 = arith.extui %14 : i1 to i32
    %c0_i32_7 = arith.constant 0 : i32
    %16 = arith.cmpi ne, %15, %c0_i32_7 : i32
    scf.if %16 {
      %c0_10 = arith.constant 0 : index
      %c0_11 = arith.constant 0 : index
      %20 = vector.load %arg9[%c0_10, %c0_11] : memref<128x128xf32, #tpu.memory_space<vmem>>, vector<128x128xf32>
      %21 = arith.extf %6 : vector<128x128xbf16> to vector<128x128xf32>
      %22 = arith.addf %20, %21 : vector<128x128xf32>
      %c0_12 = arith.constant 0 : index
      %c0_13 = arith.constant 0 : index
      %23 = vector.load %arg9[%c0_12, %c0_13] : memref<128x128xf32, #tpu.memory_space<vmem>>, vector<128x128xf32>
      tpu.vector_store %arg9[%c0_12, %c0_13], %22 {strides = array<i32>} : memref<128x128xf32, #tpu.memory_space<vmem>>, vector<128x128xf32>,
    } else {
    }
    %c0_i32_8 = arith.constant 0 : i32
    %17 = arith.cmpi eq, %arg1, %c0_i32_8 : i32
    %18 = arith.extui %17 : i1 to i32
    %c0_i32_9 = arith.constant 0 : i32
    %19 = arith.cmpi ne, %18, %c0_i32_9 : i32
    scf.if %19 {
      %c0_10 = arith.constant 0 : index
      %c0_11 = arith.constant 0 : index
      %20 = vector.load %arg9[%c0_10, %c0_11] : memref<128x128xf32, #tpu.memory_space<vmem>>, vector<128x128xf32>
      %21 = arith.truncf %20 : vector<128x128xf32> to vector<128x128xbf16>
      %c0_12 = arith.constant 0 : index
      %c0_13 = arith.constant 0 : index
      %22 = vector.load %arg4[%c0_12, %c0_13] : memref<128x128xbf16, #tpu.memory_space<vmem>>, vector<128x128xbf16>
      %cst_14 = arith.constant dense<0.000000e+00> : vector<128x128xf32>
      %23 = tpu.matmul %21, %22, %cst_14 {dimension_numbers = #tpu.dot_dimension_numbers<[1], [0], [0], [1], [0, 0, 1, 1], [], []>} : vector<128x128xbf16>, vector<128x128xbf16>, vector<128x128xf32> -> vector<128x128xf32>
      %c0_15 = arith.constant 0 : index
      %c0_16 = arith.constant 0 : index
      %24 = vector.load %arg5[%c0_15, %c0_16] : memref<1x128xf32, #tpu.memory_space<vmem>>, vector<1x128xf32>
      %25 = vector.broadcast %24 : vector<1x128xf32> to vector<128x128xf32>
      %26 = arith.addf %23, %25 : vector<128x128xf32>
      %cst_17 = arith.constant 0.000000e+00 : f32
      %27 = vector.broadcast %cst_17 : f32 to vector<128x128xf32>
      %28 = arith.maximumf %26, %27 : vector<128x128xf32>
      %29 = arith.truncf %28 : vector<128x128xf32> to vector<128x128xbf16>
      %c0_18 = arith.constant 0 : index
      %c0_19 = arith.constant 0 : index
      %30 = vector.load %arg6[%c0_18, %c0_19] : memref<128x128xbf16, #tpu.memory_space<vmem>>, vector<128x128xbf16>
      %cst_20 = arith.constant dense<0.000000e+00> : vector<128x128xf32>
      %31 = tpu.matmul %29, %30, %cst_20 {dimension_numbers = #tpu.dot_dimension_numbers<[1], [0], [0], [1], [0, 0, 1, 1], [], []>} : vector<128x128xbf16>, vector<128x128xbf16>, vector<128x128xf32> -> vector<128x128xf32>
      %c0_21 = arith.constant 0 : index
      %c0_22 = arith.constant 0 : index
      %32 = vector.load %arg7[%c0_21, %c0_22] : memref<1x128xf32, #tpu.memory_space<vmem>>, vector<1x128xf32>
      %33 = vector.broadcast %32 : vector<1x128xf32> to vector<128x128xf32>
      %34 = arith.addf %31, %33 : vector<128x128xf32>
      %cst_23 = arith.constant 0.000000e+00 : f32
      %35 = vector.broadcast %cst_23 : f32 to vector<128x128xf32>
      %36 = arith.maximumf %34, %35 : vector<128x128xf32>
      %37 = arith.truncf %36 : vector<128x128xf32> to vector<128x128xbf16>
      %c0_24 = arith.constant 0 : index
      %c0_25 = arith.constant 0 : index
      %38 = vector.load %arg8[%c0_24, %c0_25] : memref<128x128xbf16, #tpu.memory_space<vmem>>, vector<128x128xbf16>
      tpu.vector_store %arg8[%c0_24, %c0_25], %37 {strides = array<i32>} : memref<128x128xbf16, #tpu.memory_space<vmem>>, vector<128x128xbf16>,
    } else {
    }
    return
  }
  func.func @transform_0(%arg0: i32, %arg1: i32) -> (i32, i32) {
    %c0_i32 = arith.constant 0 : i32
    return %arg0, %arg1 : i32, i32
  }
  func.func @transform_1(%arg0: i32, %arg1: i32) -> (i32, i32) {
    %c0_i32 = arith.constant 0 : i32
    %c0_i32_0 = arith.constant 0 : i32
    %c0_i32_1 = arith.constant 0 : i32
    return %c0_i32, %c0_i32_0 : i32, i32
  }
  func.func @transform_2(%arg0: i32, %arg1: i32) -> (i32, i32) {
    %c0_i32 = arith.constant 0 : i32
    %c0_i32_0 = arith.constant 0 : i32
    %c0_i32_1 = arith.constant 0 : i32
    return %c0_i32, %c0_i32_0 : i32, i32
  }
  func.func @transform_3(%arg0: i32, %arg1: i32) -> (i32, i32) {
    %c0_i32 = arith.constant 0 : i32
    %c0_i32_0 = arith.constant 0 : i32
    %c0_i32_1 = arith.constant 0 : i32
    return %c0_i32, %c0_i32_0 : i32, i32
  }
  func.func @transform_4(%arg0: i32, %arg1: i32) -> (i32, i32) {
    %c0_i32 = arith.constant 0 : i32
    %c0_i32_0 = arith.constant 0 : i32
    %c0_i32_1 = arith.constant 0 : i32
    return %c0_i32, %c0_i32_0 : i32, i32
  }
  func.func @transform_5(%arg0: i32, %arg1: i32) -> (i32, i32) {
    %c0_i32 = arith.constant 0 : i32
    %c0_i32_0 = arith.constant 0 : i32
    %c0_i32_1 = arith.constant 0 : i32
    return %c0_i32, %c0_i32_0 : i32, i32
  }
  func.func @transform_6(%arg0: i32, %arg1: i32) -> (i32, i32) {
    %c0_i32 = arith.constant 0 : i32
    %c0_i32_0 = arith.constant 0 : i32
    return %arg0, %c0_i32 : i32, i32
  }
}

module attributes {stable_mosaic.version = 11 : i64} {
  func.func @pool_head_kernel(%arg0: i32, %arg1: memref<8x128xbf16, #tpu.memory_space<vmem>>, %arg2: memref<128x128xbf16, #tpu.memory_space<vmem>>, %arg3: memref<128x128xf32, #tpu.memory_space<vmem>>, %arg4: memref<1x128xf32, #tpu.memory_space<vmem>>, %arg5: memref<8x1xf32, #tpu.memory_space<vmem>>, %arg6: memref<8x128xf32, #tpu.memory_space<vmem>>, %arg7: memref<8x128xf32, #tpu.memory_space<vmem>>) attributes {dimension_semantics = [#tpu.dimension_semantics<arbitrary>], iteration_bounds = array<i64: 1>, scalar_prefetch = 0 : i64, scratch_operands = 1 : i64, tpu.core_type = #tpu.core_type<tc>, window_params = [{transform_indices = @transform_0, window_bounds = array<i64: 8, 128>}, {transform_indices = @transform_1, window_bounds = array<i64: 128, 128>}, {pipeline_mode = #tpu.pipeline_mode<synchronous>, transform_indices = @transform_2, window_bounds = array<i64: 128, 128>}, {pipeline_mode = #tpu.pipeline_mode<synchronous>, transform_indices = @transform_3, window_bounds = array<i64: 1, 128>}, {pipeline_mode = #tpu.pipeline_mode<synchronous>, transform_indices = @transform_4, window_bounds = array<i64: 8, 1>}, {pipeline_mode = #tpu.pipeline_mode<synchronous>, transform_indices = @transform_5, window_bounds = array<i64: 8, 128>}]} {
    %c0_i32 = arith.constant 0 : i32
    %0 = arith.cmpi eq, %arg0, %c0_i32 : i32
    %1 = arith.extui %0 : i1 to i32
    %c0_i32_0 = arith.constant 0 : i32
    %2 = arith.cmpi ne, %1, %c0_i32_0 : i32
    scf.if %2 {
      %cst_10 = arith.constant 0.000000e+00 : f32
      %12 = vector.broadcast %cst_10 : f32 to vector<8x128xf32>
      %c0_11 = arith.constant 0 : index
      %c0_12 = arith.constant 0 : index
      %13 = vector.load %arg7[%c0_11, %c0_12] : memref<8x128xf32, #tpu.memory_space<vmem>>, vector<8x128xf32>
      tpu.vector_store %arg7[%c0_11, %c0_12], %12 {strides = array<i32>} : memref<8x128xf32, #tpu.memory_space<vmem>>, vector<8x128xf32>,
    } else {
    }
    %c0 = arith.constant 0 : index
    %c0_1 = arith.constant 0 : index
    %3 = vector.load %arg7[%c0, %c0_1] : memref<8x128xf32, #tpu.memory_space<vmem>>, vector<8x128xf32>
    %c0_2 = arith.constant 0 : index
    %c0_3 = arith.constant 0 : index
    %4 = vector.load %arg1[%c0_2, %c0_3] : memref<8x128xbf16, #tpu.memory_space<vmem>>, vector<8x128xbf16>
    %c0_4 = arith.constant 0 : index
    %c0_5 = arith.constant 0 : index
    %5 = vector.load %arg2[%c0_4, %c0_5] : memref<128x128xbf16, #tpu.memory_space<vmem>>, vector<128x128xbf16>
    %cst = arith.constant dense<0.000000e+00> : vector<8x128xf32>
    %6 = tpu.matmul %4, %5, %cst {dimension_numbers = #tpu.dot_dimension_numbers<[1], [0], [0], [1], [0, 0, 1, 1], [], []>} : vector<8x128xbf16>, vector<128x128xbf16>, vector<8x128xf32> -> vector<8x128xf32>
    %7 = arith.addf %3, %6 : vector<8x128xf32>
    %c0_6 = arith.constant 0 : index
    %c0_7 = arith.constant 0 : index
    %8 = vector.load %arg7[%c0_6, %c0_7] : memref<8x128xf32, #tpu.memory_space<vmem>>, vector<8x128xf32>
    tpu.vector_store %arg7[%c0_6, %c0_7], %7 {strides = array<i32>} : memref<8x128xf32, #tpu.memory_space<vmem>>, vector<8x128xf32>,
    %c0_i32_8 = arith.constant 0 : i32
    %9 = arith.cmpi eq, %arg0, %c0_i32_8 : i32
    %10 = arith.extui %9 : i1 to i32
    %c0_i32_9 = arith.constant 0 : i32
    %11 = arith.cmpi ne, %10, %c0_i32_9 : i32
    scf.if %11 {
      %c0_10 = arith.constant 0 : index
      %c0_11 = arith.constant 0 : index
      %12 = vector.load %arg7[%c0_10, %c0_11] : memref<8x128xf32, #tpu.memory_space<vmem>>, vector<8x128xf32>
      %c0_12 = arith.constant 0 : index
      %c0_13 = arith.constant 0 : index
      %13 = vector.load %arg5[%c0_12, %c0_13] : memref<8x1xf32, #tpu.memory_space<vmem>>, vector<8x1xf32>
      %14 = vector.broadcast %13 : vector<8x1xf32> to vector<8x128xf32>
      %15 = arith.mulf %12, %14 : vector<8x128xf32>
      %c0_14 = arith.constant 0 : index
      %c0_15 = arith.constant 0 : index
      %16 = vector.load %arg3[%c0_14, %c0_15] : memref<128x128xf32, #tpu.memory_space<vmem>>, vector<128x128xf32>
      %cst_16 = arith.constant dense<0.000000e+00> : vector<8x128xf32>
      %17 = tpu.matmul %15, %16, %cst_16 {dimension_numbers = #tpu.dot_dimension_numbers<[1], [0], [0], [1], [0, 0, 1, 1], [], []>} : vector<8x128xf32>, vector<128x128xf32>, vector<8x128xf32> -> vector<8x128xf32>
      %c0_17 = arith.constant 0 : index
      %c0_18 = arith.constant 0 : index
      %18 = vector.load %arg4[%c0_17, %c0_18] : memref<1x128xf32, #tpu.memory_space<vmem>>, vector<1x128xf32>
      %19 = vector.broadcast %18 : vector<1x128xf32> to vector<8x128xf32>
      %20 = arith.addf %17, %19 : vector<8x128xf32>
      %c0_19 = arith.constant 0 : index
      %c0_20 = arith.constant 0 : index
      %21 = vector.load %arg6[%c0_19, %c0_20] : memref<8x128xf32, #tpu.memory_space<vmem>>, vector<8x128xf32>
      tpu.vector_store %arg6[%c0_19, %c0_20], %20 {strides = array<i32>} : memref<8x128xf32, #tpu.memory_space<vmem>>, vector<8x128xf32>,
    } else {
    }
    return
  }
  func.func @transform_0(%arg0: i32) -> (i32, i32) {
    %c0_i32 = arith.constant 0 : i32
    %c0_i32_0 = arith.constant 0 : i32
    return %c0_i32, %arg0 : i32, i32
  }
  func.func @transform_1(%arg0: i32) -> (i32, i32) {
    %c0_i32 = arith.constant 0 : i32
    %c0_i32_0 = arith.constant 0 : i32
    return %arg0, %c0_i32 : i32, i32
  }
  func.func @transform_2(%arg0: i32) -> (i32, i32) {
    %c0_i32 = arith.constant 0 : i32
    %c0_i32_0 = arith.constant 0 : i32
    %c0_i32_1 = arith.constant 0 : i32
    return %c0_i32, %c0_i32_0 : i32, i32
  }
  func.func @transform_3(%arg0: i32) -> (i32, i32) {
    %c0_i32 = arith.constant 0 : i32
    %c0_i32_0 = arith.constant 0 : i32
    %c0_i32_1 = arith.constant 0 : i32
    return %c0_i32, %c0_i32_0 : i32, i32
  }
  func.func @transform_4(%arg0: i32) -> (i32, i32) {
    %c0_i32 = arith.constant 0 : i32
    %c0_i32_0 = arith.constant 0 : i32
    %c0_i32_1 = arith.constant 0 : i32
    return %c0_i32, %c0_i32_0 : i32, i32
  }
  func.func @transform_5(%arg0: i32) -> (i32, i32) {
    %c0_i32 = arith.constant 0 : i32
    %c0_i32_0 = arith.constant 0 : i32
    %c0_i32_1 = arith.constant 0 : i32
    return %c0_i32, %c0_i32_0 : i32, i32
  }
}

</mosaic_0001>

<llo_original>
// kernel: gin_forward.5
$region0: #{gin_forward.5}
  #allocation0 [shape = 'u32[]', space=smem, size = 0x4, offset = 0x4, fixed_abs, tag = 'smem constant byte address 0x4 - core index']
  #allocation1 [shape = 'u32[72,128]{1,0:T(1,128)}', space=vmem, size = 0x9000, scoped, tag = 'internal scratch']
  #allocation2 [shape = 'f32[8,128]{1,0:T(8,128)}', space=vmem, size = 0x1000, scoped, tag = 'scratch operand']
  %s0 = inlined_call_operand.vmem [shape: bf16[8,128], index: 0, kind: input, shape index: {}]
  %s1 = inlined_call_operand.vmem [shape: bf16[128,128], index: 1, kind: input, shape index: {}]
  %s2 = inlined_call_operand.vmem [shape: f32[128,128], index: 2, kind: input, shape index: {}]
  %s3 = inlined_call_operand.vmem [shape: f32[1,128], index: 3, kind: input, shape index: {}]
  %s4 = inlined_call_operand.vmem [shape: f32[8,1], index: 4, kind: input, shape index: {}]
  %s5 = inlined_call_operand.vmem [shape: f32[8,128], index: 5, kind: output, shape index: {}]
  %s6 = sld [smem:[#allocation0]]
  $region38: #{gin_forward.5} parent=0
    _
  %s8 = ssub.s32 1, %s6
  %s9 = scalar_select 0, %s8, %s6
  // Predicated region
  $region2: #{gin_forward.5} parent=0 // pred_check
    _
  $region3: #{gin_forward.5} parent=0 // pred_check_branch
    %11 = sbr.rel (0) target = $region5
  $region4: #{gin_forward.5} parent=0 // pred_region
    _
  $region5: #{gin_forward.5} parent=0 // pred_fallthru
    _
  // Predicated region
  $region6: #{gin_forward.5} parent=0 // pred_check
    _
  $region7: #{gin_forward.5} parent=0 // pred_check_branch
    %13 = sbr.rel (0) target = $region9
  $region8: #{gin_forward.5} parent=0 // pred_region
    _
  $region9: #{gin_forward.5} parent=0 // pred_fallthru
    _
  // Predicated region
  $region10: #{gin_forward.5} parent=0 // pred_check
    _
  $region11: #{gin_forward.5} parent=0 // pred_check_branch
    %15 = sbr.rel (0) target = $region13
  $region12: #{gin_forward.5} parent=0 // pred_region
    _
  $region13: #{gin_forward.5} parent=0 // pred_fallthru
    _
  // Predicated region
  $region14: #{gin_forward.5} parent=0 // pred_check
    _
  $region15: #{gin_forward.5} parent=0 // pred_check_branch
    %17 = sbr.rel (0) target = $region17
  $region16: #{gin_forward.5} parent=0 // pred_region
    _
  $region17: #{gin_forward.5} parent=0 // pred_fallthru
    _
  // Predicated region
  $region18: #{gin_forward.5} parent=0 // pred_check
    _
  $region19: #{gin_forward.5} parent=0 // pred_check_branch
    %19 = sbr.rel (0) target = $region21
  $region20: #{gin_forward.5} parent=0 // pred_region
    _
  $region21: #{gin_forward.5} parent=0 // pred_fallthru
    _
  %p20 = scmp.eq.s32.totalorder 0, 0
  // Predicated region
  $region22: #{gin_forward.5} parent=0 // pred_check
    %p21 = pneg %p20
  $region23: #{gin_forward.5} parent=0 // pred_check_branch
    %23 = sbr.rel (%p21) target = $region25
  $region24: #{gin_forward.5} parent=0 // pred_region
    %24 = vst [vmem:[#allocation2] sm:$0xff] 0.0
  $region25: #{gin_forward.5} parent=0 // pred_fallthru
    _
  %v25 = vld [vmem:[#allocation2] sm:$0xff]
  %v26 = vld [vmem:[%s0] sm:$0xf]
  %v27 = vld [vmem:[%s1] sm:$0xf]
  %v28 = vld [vmem:[%s1 + $0x4] sm:$0xf]
  %v29 = vld [vmem:[%s1 + $0x8] sm:$0xf]
  %v30 = vld [vmem:[%s1 + $0xc] sm:$0xf]
  %v31 = vld [vmem:[%s1 + $0x10] sm:$0xf]
  %v32 = vld [vmem:[%s1 + $0x14] sm:$0xf]
  %v33 = vld [vmem:[%s1 + $0x18] sm:$0xf]
  %v34 = vld [vmem:[%s1 + $0x1c] sm:$0xf]
  %v35 = vld [vmem:[%s1 + $0x20] sm:$0xf]
  %v36 = vld [vmem:[%s1 + $0x24] sm:$0xf]
  %v37 = vld [vmem:[%s1 + $0x28] sm:$0xf]
  %v38 = vld [vmem:[%s1 + $0x2c] sm:$0xf]
  %v39 = vld [vmem:[%s1 + $0x30] sm:$0xf]
  %v40 = vld [vmem:[%s1 + $0x34] sm:$0xf]
  %v41 = vld [vmem:[%s1 + $0x38] sm:$0xf]
  %v42 = vld [vmem:[%s1 + $0x3c] sm:$0xf]
  %v59 = vunpack.c.l.b16 %v27
  %v60 = vunpack.c.l.b16 %v28
  %v61 = vunpack.c.l.b16 %v29
  %v62 = vunpack.c.l.b16 %v30
  %v63 = vunpack.c.l.b16 %v31
  %v64 = vunpack.c.l.b16 %v32
  %v65 = vunpack.c.l.b16 %v33
  %v66 = vunpack.c.l.b16 %v34
  %v67 = vunpack.c.l.b16 %v35
  %v68 = vunpack.c.l.b16 %v36
  %v69 = vunpack.c.l.b16 %v37
  %v70 = vunpack.c.l.b16 %v38
  %v71 = vunpack.c.l.b16 %v39
  %v72 = vunpack.c.l.b16 %v40
  %v73 = vunpack.c.l.b16 %v41
  %v74 = vunpack.c.l.b16 %v42
  %v75 = vpack.c.b16 %v60, %v59
  %v76 = vpack.c.b16 %v62, %v61
  %v77 = vpack.c.b16 %v64, %v63
  %v78 = vpack.c.b16 %v66, %v65
  %v79 = vpack.c.b16 %v68, %v67
  %v80 = vpack.c.b16 %v70, %v69
  %v81 = vpack.c.b16 %v72, %v71
  %v82 = vpack.c.b16 %v74, %v73
  %91 = vmatpush.bf16.msra.mxu0 %v82
  %92 = vmatpush.bf16.msra.mxu0 %v81
  %93 = vmatpush.bf16.msra.mxu0 %v80
  %94 = vmatpush.bf16.msra.mxu0 %v79
  %95 = vmatpush.bf16.msra.mxu0 %v78
  %96 = vmatpush.bf16.msra.mxu0 %v77
  %97 = vmatpush.bf16.msra.mxu0 %v76
  %98 = vmatpush.bf16.msra.mxu0 %v75
  %99 = vmatmul.bf16.gmra.mxu0 %v26
  %v100 = vpop.f32.mrf.mxu0
  %v101 = vadd.f32 0.0, %v100
  %v102 = vpop.f32.mrf.mxu0
  %103 = vdwg.mxu0
  %v104 = vadd.f32 %v25, %v101
  %105 = vst [vmem:[#allocation2] sm:$0xff] %v104
  // Predicated region
  $region26: #{gin_forward.5} parent=0 // pred_check
    %p106 = pneg %p20
  $region27: #{gin_forward.5} parent=0 // pred_check_branch
    %108 = sbr.rel (%p106) target = $region29
  $region28: #{gin_forward.5} parent=0 // pred_region
    %v109 = vld [vmem:[#allocation2] sm:$0xff]
    %v110 = vld [vmem:[%s4] sm:$0xff]
    %112 = vset.pattern.permute.xlu0 0
    %113 = vperm.xlu0 %112, %v110
    %v114 = vpop.permute.xlu0 %113
    %v116 = vmul.f32 %v109, %v114
    %v117 = vld [vmem:[%s2] sm:$0xff]
    %v118 = vld [vmem:[%s2 + $0x8] sm:$0xff]
    %v119 = vld [vmem:[%s2 + $0x10] sm:$0xff]
    %v120 = vld [vmem:[%s2 + $0x18] sm:$0xff]
    %v121 = vld [vmem:[%s2 + $0x20] sm:$0xff]
    %v122 = vld [vmem:[%s2 + $0x28] sm:$0xff]
    %v123 = vld [vmem:[%s2 + $0x30] sm:$0xff]
    %v124 = vld [vmem:[%s2 + $0x38] sm:$0xff]
    %v125 = vld [vmem:[%s2 + $0x40] sm:$0xff]
    %v126 = vld [vmem:[%s2 + $0x48] sm:$0xff]
    %v127 = vld [vmem:[%s2 + $0x50] sm:$0xff]
    %v128 = vld [vmem:[%s2 + $0x58] sm:$0xff]
    %v129 = vld [vmem:[%s2 + $0x60] sm:$0xff]
    %v130 = vld [vmem:[%s2 + $0x68] sm:$0xff]
    %v131 = vld [vmem:[%s2 + $0x70] sm:$0xff]
    %v132 = vld [vmem:[%s2 + $0x78] sm:$0xff]
    %v133 = vld [vmem:[%s3] sm:$0x1]
    %v135 = vperm.slane %v133, 0
    %137 = vmatpush.msra.mxu0 %v132
    %138 = vmatpush.msra.mxu0 %v131
    %139 = vmatpush.msra.mxu0 %v130
    %140 = vmatpush.msra.mxu0 %v129
    %141 = vmatpush.msra.mxu0 %v128
    %142 = vmatpush.msra.mxu0 %v127
    %143 = vmatpush.msra.mxu0 %v126
    %144 = vmatpush.msra.mxu0 %v125
    %145 = vmatpush.msra.mxu0 %v124
    %146 = vmatpush.msra.mxu0 %v123
    %147 = vmatpush.msra.mxu0 %v122
    %148 = vmatpush.msra.mxu0 %v121
    %149 = vmatpush.msra.mxu0 %v120
    %150 = vmatpush.msra.mxu0 %v119
    %151 = vmatpush.msra.mxu0 %v118
    %152 = vmatpush.msra.mxu0 %v117
    %153 = vmatmul.f32.gmra.mxu0 %v116
    %v154 = vpop.f32.mrf.mxu0
    %v155 = vadd.f32 %v135, %v154
    %156 = vdwg.mxu0
    %157 = vst [vmem:[%s5] sm:$0xff] %v155
  $region29: #{gin_forward.5} parent=0 // pred_fallthru
    _
  // Predicated region
  $region30: #{gin_forward.5} parent=0 // pred_check
    _
  $region31: #{gin_forward.5} parent=0 // pred_check_branch
    %159 = sbr.rel (0) target = $region33
  $region32: #{gin_forward.5} parent=0 // pred_region
    _
  $region33: #{gin_forward.5} parent=0 // pred_fallthru
    _
  // Predicated region
  $region34: #{gin_forward.5} parent=0 // pred_check
    _
  $region35: #{gin_forward.5} parent=0 // pred_check_branch
    %161 = sbr.rel (0) target = $region37
  $region36: #{gin_forward.5} parent=0 // pred_region
    _
  $region37: #{gin_forward.5} parent=0 // pred_fallthru
    _

// kernel: gin_forward.3
$region0: #{gin_forward.3}
  #allocation0 [shape = 'u32[]', space=smem, size = 0x4, offset = 0x4, fixed_abs, tag = 'smem constant byte address 0x4 - core index']
  #allocation1 [shape = 'u32[72,128]{1,0:T(1,128)}', space=vmem, size = 0x9000, scoped, tag = 'internal scratch']
  #allocation2 [shape = 'f32[128,128]{1,0:T(8,128)}', space=vmem, size = 0x10000, scoped, tag = 'scratch operand']
  %s0 = inlined_call_operand.vmem [shape: s8[128,128], index: 0, kind: input, shape index: {}]
  %s1 = inlined_call_operand.vmem [shape: bf16[128,128], index: 1, kind: input, shape index: {}]
  %s2 = inlined_call_operand.vmem [shape: bf16[128,128], index: 2, kind: input, shape index: {}]
  %s3 = inlined_call_operand.vmem [shape: f32[1,128], index: 3, kind: input, shape index: {}]
  %s4 = inlined_call_operand.vmem [shape: bf16[128,128], index: 4, kind: input, shape index: {}]
  %s5 = inlined_call_operand.vmem [shape: f32[1,128], index: 5, kind: input, shape index: {}]
  %s6 = inlined_call_operand.vmem [shape: bf16[128,128], index: 6, kind: output, shape index: {}]
  %s7 = sld [smem:[#allocation0]]
  $region46: #{gin_forward.3} parent=0
    _
  %s9 = ssub.s32 1, %s7
  %s10 = scalar_select 0, %s9, %s7
  // Predicated region
  $region2: #{gin_forward.3} parent=0 // pred_check
    _
  $region3: #{gin_forward.3} parent=0 // pred_check_branch
    %12 = sbr.rel (0) target = $region5
  $region4: #{gin_forward.3} parent=0 // pred_region
    _
  $region5: #{gin_forward.3} parent=0 // pred_fallthru
    _
  // Predicated region
  $region6: #{gin_forward.3} parent=0 // pred_check
    _
  $region7: #{gin_forward.3} parent=0 // pred_check_branch
    %14 = sbr.rel (0) target = $region9
  $region8: #{gin_forward.3} parent=0 // pred_region
    _
  $region9: #{gin_forward.3} parent=0 // pred_fallthru
    _
  // Predicated region
  $region10: #{gin_forward.3} parent=0 // pred_check
    _
  $region11: #{gin_forward.3} parent=0 // pred_check_branch
    %16 = sbr.rel (0) target = $region13
  $region12: #{gin_forward.3} parent=0 // pred_region
    _
  $region13: #{gin_forward.3} parent=0 // pred_fallthru
    _
  // Predicated region
  $region14: #{gin_forward.3} parent=0 // pred_check
    _
  $region15: #{gin_forward.3} parent=0 // pred_check_branch
    %18 = sbr.rel (0) target = $region17
  $region16: #{gin_forward.3} parent=0 // pred_region
    _
  $region17: #{gin_forward.3} parent=0 // pred_fallthru
    _
  // Predicated region
  $region18: #{gin_forward.3} parent=0 // pred_check
    _
  $region19: #{gin_forward.3} parent=0 // pred_check_branch
    %20 = sbr.rel (0) target = $region21
  $region20: #{gin_forward.3} parent=0 // pred_region
    _
  $region21: #{gin_forward.3} parent=0 // pred_fallthru
    _
  // Predicated region
  $region22: #{gin_forward.3} parent=0 // pred_check
    _
  $region23: #{gin_forward.3} parent=0 // pred_check_branch
    %22 = sbr.rel (0) target = $region25
  $region24: #{gin_forward.3} parent=0 // pred_region
    _
  $region25: #{gin_forward.3} parent=0 // pred_fallthru
    _
  %p23 = scmp.eq.s32.totalorder 0, 0
  // Predicated region
  $region26: #{gin_forward.3} parent=0 // pred_check
    %p24 = pneg %p23
  $region27: #{gin_forward.3} parent=0 // pred_check_branch
    %26 = sbr.rel (%p24) target = $region29
  $region28: #{gin_forward.3} parent=0 // pred_region
    %27 = vst [vmem:[#allocation2] sm:$0xff] 0.0
    %28 = vst [vmem:[#allocation2 + $0x8] sm:$0xff] 0.0
    %29 = vst [vmem:[#allocation2 + $0x10] sm:$0xff] 0.0
    %30 = vst [vmem:[#allocation2 + $0x18] sm:$0xff] 0.0
    %31 = vst [vmem:[#allocation2 + $0x20] sm:$0xff] 0.0
    %32 = vst [vmem:[#allocation2 + $0x28] sm:$0xff] 0.0
    %33 = vst [vmem:[#allocation2 + $0x30] sm:$0xff] 0.0
    %34 = vst [vmem:[#allocation2 + $0x38] sm:$0xff] 0.0
    %35 = vst [vmem:[#allocation2 + $0x40] sm:$0xff] 0.0
    %36 = vst [vmem:[#allocation2 + $0x48] sm:$0xff] 0.0
    %37 = vst [vmem:[#allocation2 + $0x50] sm:$0xff] 0.0
    %38 = vst [vmem:[#allocation2 + $0x58] sm:$0xff] 0.0
    %39 = vst [vmem:[#allocation2 + $0x60] sm:$0xff] 0.0
    %40 = vst [vmem:[#allocation2 + $0x68] sm:$0xff] 0.0
    %41 = vst [vmem:[#allocation2 + $0x70] sm:$0xff] 0.0
    %42 = vst [vmem:[#allocation2 + $0x78] sm:$0xff] 0.0
  $region29: #{gin_forward.3} parent=0 // pred_fallthru
    _
  %s43 = smul.u32 0, 128
  %s44 = sshra.s32 %s43, 3
  %s45 = sand.u32 %s43, 7
  %s46 = smul.addr %s44, 4
  %s47 = scalar_lea.vmem %s1, %s46
  %v48 = vld [vmem:[%s47] sm:$0xf]
  %v49 = vld [vmem:[%s47 + $0x4] sm:$0xf]
  %v50 = vld [vmem:[%s47 + $0x8] sm:$0xf]
  %v51 = vld [vmem:[%s47 + $0xc] sm:$0xf]
  %v52 = vld [vmem:[%s47 + $0x10] sm:$0xf]
  %v53 = vld [vmem:[%s47 + $0x14] sm:$0xf]
  %v54 = vld [vmem:[%s47 + $0x18] sm:$0xf]
  %v55 = vld [vmem:[%s47 + $0x1c] sm:$0xf]
  %v56 = vld [vmem:[%s47 + $0x20] sm:$0xf]
  %v57 = vld [vmem:[%s47 + $0x24] sm:$0xf]
  %v58 = vld [vmem:[%s47 + $0x28] sm:$0xf]
  %v59 = vld [vmem:[%s47 + $0x2c] sm:$0xf]
  %v60 = vld [vmem:[%s47 + $0x30] sm:$0xf]
  %v61 = vld [vmem:[%s47 + $0x34] sm:$0xf]
  %v62 = vld [vmem:[%s47 + $0x38] sm:$0xf]
  %v63 = vld [vmem:[%s47 + $0x3c] sm:$0xf]
  %v64 = vld [vmem:[%s0] sm:$0xff]
  %v65 = vld [vmem:[%s0 + $0x8] sm:$0xff]
  %v66 = vld [vmem:[%s0 + $0x10] sm:$0xff]
  %v67 = vld [vmem:[%s0 + $0x18] sm:$0xff]
  %v68 = vunpack.c.0.s8 %v64
  %v69 = vunpack.c.1.s8 %v64
  %v70 = vunpack.c.2.s8 %v64
  %v71 = vunpack.c.3.s8 %v64
  %v72 = vunpack.c.0.s8 %v65
  %v73 = vunpack.c.1.s8 %v65
  %v74 = vunpack.c.2.s8 %v65
  %v75 = vunpack.c.3.s8 %v65
  %v76 = vunpack.c.0.s8 %v66
  %v77 = vunpack.c.1.s8 %v66
  %v78 = vunpack.c.2.s8 %v66
  %v79 = vunpack.c.3.s8 %v66
  %v80 = vunpack.c.0.s8 %v67
  %v81 = vunpack.c.1.s8 %v67
  %v82 = vunpack.c.2.s8 %v67
  %v83 = vunpack.c.3.s8 %v67
  %v84 = vcvt.s32.f32 %v68
  %v85 = vcvt.s32.f32 %v69
  %v86 = vcvt.s32.f32 %v70
  %v87 = vcvt.s32.f32 %v71
  %v88 = vcvt.s32.f32 %v72
  %v89 = vcvt.s32.f32 %v73
  %v90 = vcvt.s32.f32 %v74
  %v91 = vcvt.s32.f32 %v75
  %v92 = vcvt.s32.f32 %v76
  %v93 = vcvt.s32.f32 %v77
  %v94 = vcvt.s32.f32 %v78
  %v95 = vcvt.s32.f32 %v79
  %v96 = vcvt.s32.f32 %v80
  %v97 = vcvt.s32.f32 %v81
  %v98 = vcvt.s32.f32 %v82
  %v99 = vcvt.s32.f32 %v83
  %v100 = vpack.c.bf16 %v85, %v84
  %v101 = vpack.c.bf16 %v87, %v86
  %v102 = vpack.c.bf16 %v89, %v88
  %v103 = vpack.c.bf16 %v91, %v90
  %v104 = vpack.c.bf16 %v93, %v92
  %v105 = vpack.c.bf16 %v95, %v94
  %v106 = vpack.c.bf16 %v97, %v96
  %v107 = vpack.c.bf16 %v99, %v98
  %v108 = vld [vmem:[#allocation2] sm:$0xff]
  %v109 = vld [vmem:[#allocation2 + $0x8] sm:$0xff]
  %v110 = vld [vmem:[#allocation2 + $0x10] sm:$0xff]
  %v111 = vld [vmem:[#allocation2 + $0x18] sm:$0xff]
  %v112 = vld [vmem:[#allocation2 + $0x20] sm:$0xff]
  %v113 = vld [vmem:[#allocation2 + $0x28] sm:$0xff]
  %v114 = vld [vmem:[#allocation2 + $0x30] sm:$0xff]
  %v115 = vld [vmem:[#allocation2 + $0x38] sm:$0xff]
  %v116 = vld [vmem:[#allocation2 + $0x40] sm:$0xff]
  %v117 = vld [vmem:[#allocation2 + $0x48] sm:$0xff]
  %v118 = vld [vmem:[#allocation2 + $0x50] sm:$0xff]
  %v119 = vld [vmem:[#allocation2 + $0x58] sm:$0xff]
  %v120 = vld [vmem:[#allocation2 + $0x60] sm:$0xff]
  %v121 = vld [vmem:[#allocation2 + $0x68] sm:$0xff]
  %v122 = vld [vmem:[#allocation2 + $0x70] sm:$0xff]
  %v123 = vld [vmem:[#allocation2 + $0x78] sm:$0xff]
  %v140 = vunpack.c.l.b16 %v48
  %v141 = vunpack.c.l.b16 %v49
  %v142 = vunpack.c.l.b16 %v50
  %v143 = vunpack.c.l.b16 %v51
  %v144 = vunpack.c.l.b16 %v52
  %v145 = vunpack.c.l.b16 %v53
  %v146 = vunpack.c.l.b16 %v54
  %v147 = vunpack.c.l.b16 %v55
  %v148 = vunpack.c.l.b16 %v56
  %v149 = vunpack.c.l.b16 %v57
  %v150 = vunpack.c.l.b16 %v58
  %v151 = vunpack.c.l.b16 %v59
  %v152 = vunpack.c.l.b16 %v60
  %v153 = vunpack.c.l.b16 %v61
  %v154 = vunpack.c.l.b16 %v62
  %v155 = vunpack.c.l.b16 %v63
  %v156 = vpack.c.b16 %v141, %v140
  %v157 = vpack.c.b16 %v143, %v142
  %v158 = vpack.c.b16 %v145, %v144
  %v159 = vpack.c.b16 %v147, %v146
  %v160 = vpack.c.b16 %v149, %v148
  %v161 = vpack.c.b16 %v151, %v150
  %v162 = vpack.c.b16 %v153, %v152
  %v163 = vpack.c.b16 %v155, %v154
  %172 = vmatpush.bf16.msra.mxu0 %v163
  %173 = vmatpush.bf16.msra.mxu0 %v162
  %174 = vmatpush.bf16.msra.mxu0 %v161
  %175 = vmatpush.bf16.msra.mxu0 %v160
  %176 = vmatpush.bf16.msra.mxu0 %v159
  %177 = vmatpush.bf16.msra.mxu0 %v158
  %178 = vmatpush.bf16.msra.mxu0 %v157
  %179 = vmatpush.bf16.msra.mxu0 %v156
  %180 = vmatmul.bf16.gmra.mxu0 %v100
  %v181 = vpop.f32.mrf.mxu0
  %v182 = vadd.f32 0.0, %v181
  %v183 = vpop.f32.mrf.mxu0
  %v184 = vadd.f32 0.0, %v183
  %185 = vmatmul.bf16.gmra.mxu0 %v101
  %v186 = vpop.f32.mrf.mxu0
  %v187 = vadd.f32 0.0, %v186
  %v188 = vpop.f32.mrf.mxu0
  %v189 = vadd.f32 0.0, %v188
  %190 = vmatmul.bf16.gmra.mxu0 %v102
  %v191 = vpop.f32.mrf.mxu0
  %v192 = vadd.f32 0.0, %v191
  %v193 = vpop.f32.mrf.mxu0
  %v194 = vadd.f32 0.0, %v193
  %195 = vmatmul.bf16.gmra.mxu0 %v103
  %v196 = vpop.f32.mrf.mxu0
  %v197 = vadd.f32 0.0, %v196
  %v198 = vpop.f32.mrf.mxu0
  %v199 = vadd.f32 0.0, %v198
  %200 = vmatmul.bf16.gmra.mxu0 %v104
  %v201 = vpop.f32.mrf.mxu0
  %v202 = vadd.f32 0.0, %v201
  %v203 = vpop.f32.mrf.mxu0
  %v204 = vadd.f32 0.0, %v203
  %205 = vmatmul.bf16.gmra.mxu0 %v105
  %v206 = vpop.f32.mrf.mxu0
  %v207 = vadd.f32 0.0, %v206
  %v208 = vpop.f32.mrf.mxu0
  %v209 = vadd.f32 0.0, %v208
  %210 = vmatmul.bf16.gmra.mxu0 %v106
  %v211 = vpop.f32.mrf.mxu0
  %v212 = vadd.f32 0.0, %v211
  %v213 = vpop.f32.mrf.mxu0
  %v214 = vadd.f32 0.0, %v213
  %215 = vmatmul.bf16.gmra.mxu0 %v107
  %v216 = vpop.f32.mrf.mxu0
  %v217 = vadd.f32 0.0, %v216
  %v218 = vpop.f32.mrf.mxu0
  %v219 = vadd.f32 0.0, %v218
  %220 = vdwg.mxu0
  %v221 = vadd.f32 %v108, %v182
  %v222 = vadd.f32 %v109, %v184
  %v223 = vadd.f32 %v110, %v187
  %v224 = vadd.f32 %v111, %v189
  %v225 = vadd.f32 %v112, %v192
  %v226 = vadd.f32 %v113, %v194
  %v227 = vadd.f32 %v114, %v197
  %v228 = vadd.f32 %v115, %v199
  %v229 = vadd.f32 %v116, %v202
  %v230 = vadd.f32 %v117, %v204
  %v231 = vadd.f32 %v118, %v207
  %v232 = vadd.f32 %v119, %v209
  %v233 = vadd.f32 %v120, %v212
  %v234 = vadd.f32 %v121, %v214
  %v235 = vadd.f32 %v122, %v217
  %v236 = vadd.f32 %v123, %v219
  %237 = vst [vmem:[#allocation2] sm:$0xff] %v221
  %238 = vst [vmem:[#allocation2 + $0x8] sm:$0xff] %v222
  %239 = vst [vmem:[#allocation2 + $0x10] sm:$0xff] %v223
  %240 = vst [vmem:[#allocation2 + $0x18] sm:$0xff] %v224
  %241 = vst [vmem:[#allocation2 + $0x20] sm:$0xff] %v225
  %242 = vst [vmem:[#allocation2 + $0x28] sm:$0xff] %v226
  %243 = vst [vmem:[#allocation2 + $0x30] sm:$0xff] %v227
  %244 = vst [vmem:[#allocation2 + $0x38] sm:$0xff] %v228
  %245 = vst [vmem:[#allocation2 + $0x40] sm:$0xff] %v229
  %246 = vst [vmem:[#allocation2 + $0x48] sm:$0xff] %v230
  %247 = vst [vmem:[#allocation2 + $0x50] sm:$0xff] %v231
  %248 = vst [vmem:[#allocation2 + $0x58] sm:$0xff] %v232
  %249 = vst [vmem:[#allocation2 + $0x60] sm:$0xff] %v233
  %250 = vst [vmem:[#allocation2 + $0x68] sm:$0xff] %v234
  %251 = vst [vmem:[#allocation2 + $0x70] sm:$0xff] %v235
  %252 = vst [vmem:[#allocation2 + $0x78] sm:$0xff] %v236
  %p253 = scmp.eq.s32.totalorder 0, 0
  // Predicated region
  $region30: #{gin_forward.3} parent=0 // pred_check
    %p254 = pneg %p253
  $region31: #{gin_forward.3} parent=0 // pred_check_branch
    %256 = sbr.rel (%p254) target = $region33
  $region32: #{gin_forward.3} parent=0 // pred_region
    %v257 = vld [vmem:[#allocation2] sm:$0xff]
    %v258 = vld [vmem:[#allocation2 + $0x8] sm:$0xff]
    %v259 = vld [vmem:[#allocation2 + $0x10] sm:$0xff]
    %v260 = vld [vmem:[#allocation2 + $0x18] sm:$0xff]
    %v261 = vld [vmem:[#allocation2 + $0x20] sm:$0xff]
    %v262 = vld [vmem:[#allocation2 + $0x28] sm:$0xff]
    %v263 = vld [vmem:[#allocation2 + $0x30] sm:$0xff]
    %v264 = vld [vmem:[#allocation2 + $0x38] sm:$0xff]
    %v265 = vld [vmem:[#allocation2 + $0x40] sm:$0xff]
    %v266 = vld [vmem:[#allocation2 + $0x48] sm:$0xff]
    %v267 = vld [vmem:[#allocation2 + $0x50] sm:$0xff]
    %v268 = vld [vmem:[#allocation2 + $0x58] sm:$0xff]
    %v269 = vld [vmem:[#allocation2 + $0x60] sm:$0xff]
    %v270 = vld [vmem:[#allocation2 + $0x68] sm:$0xff]
    %v271 = vld [vmem:[#allocation2 + $0x70] sm:$0xff]
    %v272 = vld [vmem:[#allocation2 + $0x78] sm:$0xff]
    %v273 = vunpack.c.l.bf16 %v48
    %v274 = vunpack.c.l.bf16 %v49
    %v275 = vunpack.c.l.bf16 %v50
    %v276 = vunpack.c.l.bf16 %v51
    %v277 = vunpack.c.l.bf16 %v52
    %v278 = vunpack.c.l.bf16 %v53
    %v279 = vunpack.c.l.bf16 %v54
    %v280 = vunpack.c.l.bf16 %v55
    %v281 = vunpack.c.l.bf16 %v56
    %v282 = vunpack.c.l.bf16 %v57
    %v283 = vunpack.c.l.bf16 %v58
    %v284 = vunpack.c.l.bf16 %v59
    %v285 = vunpack.c.l.bf16 %v60
    %v286 = vunpack.c.l.bf16 %v61
    %v287 = vunpack.c.l.bf16 %v62
    %v288 = vunpack.c.l.bf16 %v63
    %v289 = vadd.f32 %v257, %v273
    %v290 = vadd.f32 %v258, %v274
    %v291 = vadd.f32 %v259, %v275
    %v292 = vadd.f32 %v260, %v276
    %v293 = vadd.f32 %v261, %v277
    %v294 = vadd.f32 %v262, %v278
    %v295 = vadd.f32 %v263, %v279
    %v296 = vadd.f32 %v264, %v280
    %v297 = vadd.f32 %v265, %v281
    %v298 = vadd.f32 %v266, %v282
    %v299 = vadd.f32 %v267, %v283
    %v300 = vadd.f32 %v268, %v284
    %v301 = vadd.f32 %v269, %v285
    %v302 = vadd.f32 %v270, %v286
    %v303 = vadd.f32 %v271, %v287
    %v304 = vadd.f32 %v272, %v288
    %305 = vst [vmem:[#allocation2] sm:$0xff] %v289
    %306 = vst [vmem:[#allocation2 + $0x8] sm:$0xff] %v290
    %307 = vst [vmem:[#allocation2 + $0x10] sm:$0xff] %v291
    %308 = vst [vmem:[#allocation2 + $0x18] sm:$0xff] %v292
    %309 = vst [vmem:[#allocation2 + $0x20] sm:$0xff] %v293
    %310 = vst [vmem:[#allocation2 + $0x28] sm:$0xff] %v294
    %311 = vst [vmem:[#allocation2 + $0x30] sm:$0xff] %v295
    %312 = vst [vmem:[#allocation2 + $0x38] sm:$0xff] %v296
    %313 = vst [vmem:[#allocation2 + $0x40] sm:$0xff] %v297
    %314 = vst [vmem:[#allocation2 + $0x48] sm:$0xff] %v298
    %315 = vst [vmem:[#allocation2 + $0x50] sm:$0xff] %v299
    %316 = vst [vmem:[#allocation2 + $0x58] sm:$0xff] %v300
    %317 = vst [vmem:[#allocation2 + $0x60] sm:$0xff] %v301
    %318 = vst [vmem:[#allocation2 + $0x68] sm:$0xff] %v302
    %319 = vst [vmem:[#allocation2 + $0x70] sm:$0xff] %v303
    %320 = vst [vmem:[#allocation2 + $0x78] sm:$0xff] %v304
  $region33: #{gin_forward.3} parent=0 // pred_fallthru
    _
  // Predicated region
  $region34: #{gin_forward.3} parent=0 // pred_check
    %p321 = pneg %p23
  $region35: #{gin_forward.3} parent=0 // pred_check_branch
    %323 = sbr.rel (%p321) target = $region37
  $region36: #{gin_forward.3} parent=0 // pred_region
    %v324 = vld [vmem:[#allocation2] sm:$0xff]
    %v325 = vld [vmem:[#allocation2 + $0x8] sm:$0xff]
    %v326 = vld [vmem:[#allocation2 + $0x10] sm:$0xff]
    %v327 = vld [vmem:[#allocation2 + $0x18] sm:$0xff]
    %v328 = vld [vmem:[#allocation2 + $0x20] sm:$0xff]
    %v329 = vld [vmem:[#allocation2 + $0x28] sm:$0xff]
    %v330 = vld [vmem:[#allocation2 + $0x30] sm:$0xff]
    %v331 = vld [vmem:[#allocation2 + $0x38] sm:$0xff]
    %v332 = vld [vmem:[#allocation2 + $0x40] sm:$0xff]
    %v333 = vld [vmem:[#allocation2 + $0x48] sm:$0xff]
    %v334 = vld [vmem:[#allocation2 + $0x50] sm:$0xff]
    %v335 = vld [vmem:[#allocation2 + $0x58] sm:$0xff]
    %v336 = vld [vmem:[#allocation2 + $0x60] sm:$0xff]
    %v337 = vld [vmem:[#allocation2 + $0x68] sm:$0xff]
    %v338 = vld [vmem:[#allocation2 + $0x70] sm:$0xff]
    %v339 = vld [vmem:[#allocation2 + $0x78] sm:$0xff]
    %v340 = vpack.c.bf16 %v325, %v324
    %v341 = vpack.c.bf16 %v327, %v326
    %v342 = vpack.c.bf16 %v329, %v328
    %v343 = vpack.c.bf16 %v331, %v330
    %v344 = vpack.c.bf16 %v333, %v332
    %v345 = vpack.c.bf16 %v335, %v334
    %v346 = vpack.c.bf16 %v337, %v336
    %v347 = vpack.c.bf16 %v339, %v338
    %v348 = vld [vmem:[%s2] sm:$0xf]
    %v349 = vld [vmem:[%s2 + $0x4] sm:$0xf]
    %v350 = vld [vmem:[%s2 + $0x8] sm:$0xf]
    %v351 = vld [vmem:[%s2 + $0xc] sm:$0xf]
    %v352 = vld [vmem:[%s2 + $0x10] sm:$0xf]
    %v353 = vld [vmem:[%s2 + $0x14] sm:$0xf]
    %v354 = vld [vmem:[%s2 + $0x18] sm:$0xf]
    %v355 = vld [vmem:[%s2 + $0x1c] sm:$0xf]
    %v356 = vld [vmem:[%s2 + $0x20] sm:$0xf]
    %v357 = vld [vmem:[%s2 + $0x24] sm:$0xf]
    %v358 = vld [vmem:[%s2 + $0x28] sm:$0xf]
    %v359 = vld [vmem:[%s2 + $0x2c] sm:$0xf]
    %v360 = vld [vmem:[%s2 + $0x30] sm:$0xf]
    %v361 = vld [vmem:[%s2 + $0x34] sm:$0xf]
    %v362 = vld [vmem:[%s2 + $0x38] sm:$0xf]
    %v363 = vld [vmem:[%s2 + $0x3c] sm:$0xf]
    %v364 = vld [vmem:[%s3] sm:$0x1]
    %v366 = vperm.slane %v364, 0
    %v384 = vunpack.c.l.b16 %v348
    %v385 = vunpack.c.l.b16 %v349
    %v386 = vunpack.c.l.b16 %v350
    %v387 = vunpack.c.l.b16 %v351
    %v388 = vunpack.c.l.b16 %v352
    %v389 = vunpack.c.l.b16 %v353
    %v390 = vunpack.c.l.b16 %v354
    %v391 = vunpack.c.l.b16 %v355
    %v392 = vunpack.c.l.b16 %v356
    %v393 = vunpack.c.l.b16 %v357
    %v394 = vunpack.c.l.b16 %v358
    %v395 = vunpack.c.l.b16 %v359
    %v396 = vunpack.c.l.b16 %v360
    %v397 = vunpack.c.l.b16 %v361
    %v398 = vunpack.c.l.b16 %v362
    %v399 = vunpack.c.l.b16 %v363
    %v400 = vpack.c.b16 %v385, %v384
    %v401 = vpack.c.b16 %v387, %v386
    %v402 = vpack.c.b16 %v389, %v388
    %v403 = vpack.c.b16 %v391, %v390
    %v404 = vpack.c.b16 %v393, %v392
    %v405 = vpack.c.b16 %v395, %v394
    %v406 = vpack.c.b16 %v397, %v396
    %v407 = vpack.c.b16 %v399, %v398
    %416 = vmatpush.bf16.msra.mxu0 %v407
    %417 = vmatpush.bf16.msra.mxu0 %v406
    %418 = vmatpush.bf16.msra.mxu0 %v405
    %419 = vmatpush.bf16.msra.mxu0 %v404
    %420 = vmatpush.bf16.msra.mxu0 %v403
    %421 = vmatpush.bf16.msra.mxu0 %v402
    %422 = vmatpush.bf16.msra.mxu0 %v401
    %423 = vmatpush.bf16.msra.mxu0 %v400
    %424 = vmatmul.bf16.gmra.mxu0 %v340
    %v425 = vpop.f32.mrf.mxu0
    %v426 = vadd.f32 %v366, %v425
    %v427 = vpop.f32.mrf.mxu0
    %v428 = vadd.f32 %v366, %v427
    %429 = vmatmul.bf16.gmra.mxu0 %v341
    %v430 = vpop.f32.mrf.mxu0
    %v431 = vadd.f32 %v366, %v430
    %v432 = vpop.f32.mrf.mxu0
    %v433 = vadd.f32 %v366, %v432
    %434 = vmatmul.bf16.gmra.mxu0 %v342
    %v435 = vpop.f32.mrf.mxu0
    %v436 = vadd.f32 %v366, %v435
    %v437 = vpop.f32.mrf.mxu0
    %v438 = vadd.f32 %v366, %v437
    %439 = vmatmul.bf16.gmra.mxu0 %v343
    %v440 = vpop.f32.mrf.mxu0
    %v441 = vadd.f32 %v366, %v440
    %v442 = vpop.f32.mrf.mxu0
    %v443 = vadd.f32 %v366, %v442
    %444 = vmatmul.bf16.gmra.mxu0 %v344
    %v445 = vpop.f32.mrf.mxu0
    %v446 = vadd.f32 %v366, %v445
    %v447 = vpop.f32.mrf.mxu0
    %v448 = vadd.f32 %v366, %v447
    %449 = vmatmul.bf16.gmra.mxu0 %v345
    %v450 = vpop.f32.mrf.mxu0
    %v451 = vadd.f32 %v366, %v450
    %v452 = vpop.f32.mrf.mxu0
    %v453 = vadd.f32 %v366, %v452
    %454 = vmatmul.bf16.gmra.mxu0 %v346
    %v455 = vpop.f32.mrf.mxu0
    %v456 = vadd.f32 %v366, %v455
    %v457 = vpop.f32.mrf.mxu0
    %v458 = vadd.f32 %v366, %v457
    %459 = vmatmul.bf16.gmra.mxu0 %v347
    %v460 = vpop.f32.mrf.mxu0
    %v461 = vadd.f32 %v366, %v460
    %v462 = vpop.f32.mrf.mxu0
    %v463 = vadd.f32 %v366, %v462
    %464 = vdwg.mxu0
    %v465 = vmax.f32 %v426, 0.0
    %v466 = vmax.f32 %v428, 0.0
    %v467 = vmax.f32 %v431, 0.0
    %v468 = vmax.f32 %v433, 0.0
    %v469 = vmax.f32 %v436, 0.0
    %v470 = vmax.f32 %v438, 0.0
    %v471 = vmax.f32 %v441, 0.0
    %v472 = vmax.f32 %v443, 0.0
    %v473 = vmax.f32 %v446, 0.0
    %v474 = vmax.f32 %v448, 0.0
    %v475 = vmax.f32 %v451, 0.0
    %v476 = vmax.f32 %v453, 0.0
    %v477 = vmax.f32 %v456, 0.0
    %v478 = vmax.f32 %v458, 0.0
    %v479 = vmax.f32 %v461, 0.0
    %v480 = vmax.f32 %v463, 0.0
    %v481 = vpack.c.bf16 %v466, %v465
    %v482 = vpack.c.bf16 %v468, %v467
    %v483 = vpack.c.bf16 %v470, %v469
    %v484 = vpack.c.bf16 %v472, %v471
    %v485 = vpack.c.bf16 %v474, %v473
    %v486 = vpack.c.bf16 %v476, %v475
    %v487 = vpack.c.bf16 %v478, %v477
    %v488 = vpack.c.bf16 %v480, %v479
    %v489 = vld [vmem:[%s4] sm:$0xf]
    %v490 = vld [vmem:[%s4 + $0x4] sm:$0xf]
    %v491 = vld [vmem:[%s4 + $0x8] sm:$0xf]
    %v492 = vld [vmem:[%s4 + $0xc] sm:$0xf]
    %v493 = vld [vmem:[%s4 + $0x10] sm:$0xf]
    %v494 = vld [vmem:[%s4 + $0x14] sm:$0xf]
    %v495 = vld [vmem:[%s4 + $0x18] sm:$0xf]
    %v496 = vld [vmem:[%s4 + $0x1c] sm:$0xf]
    %v497 = vld [vmem:[%s4 + $0x20] sm:$0xf]
    %v498 = vld [vmem:[%s4 + $0x24] sm:$0xf]
    %v499 = vld [vmem:[%s4 + $0x28] sm:$0xf]
    %v500 = vld [vmem:[%s4 + $0x2c] sm:$0xf]
    %v501 = vld [vmem:[%s4 + $0x30] sm:$0xf]
    %v502 = vld [vmem:[%s4 + $0x34] sm:$0xf]
    %v503 = vld [vmem:[%s4 + $0x38] sm:$0xf]
    %v504 = vld [vmem:[%s4 + $0x3c] sm:$0xf]
    %v505 = vld [vmem:[%s5] sm:$0x1]
    %v507 = vperm.slane %v505, 0
    %v525 = vunpack.c.l.b16 %v489
    %v526 = vunpack.c.l.b16 %v490
    %v527 = vunpack.c.l.b16 %v491
    %v528 = vunpack.c.l.b16 %v492
    %v529 = vunpack.c.l.b16 %v493
    %v530 = vunpack.c.l.b16 %v494
    %v531 = vunpack.c.l.b16 %v495
    %v532 = vunpack.c.l.b16 %v496
    %v533 = vunpack.c.l.b16 %v497
    %v534 = vunpack.c.l.b16 %v498
    %v535 = vunpack.c.l.b16 %v499
    %v536 = vunpack.c.l.b16 %v500
    %v537 = vunpack.c.l.b16 %v501
    %v538 = vunpack.c.l.b16 %v502
    %v539 = vunpack.c.l.b16 %v503
    %v540 = vunpack.c.l.b16 %v504
    %v541 = vpack.c.b16 %v526, %v525
    %v542 = vpack.c.b16 %v528, %v527
    %v543 = vpack.c.b16 %v530, %v529
    %v544 = vpack.c.b16 %v532, %v531
    %v545 = vpack.c.b16 %v534, %v533
    %v546 = vpack.c.b16 %v536, %v535
    %v547 = vpack.c.b16 %v538, %v537
    %v548 = vpack.c.b16 %v540, %v539
    %557 = vmatpush.bf16.msra.mxu0 %v548
    %558 = vmatpush.bf16.msra.mxu0 %v547
    %559 = vmatpush.bf16.msra.mxu0 %v546
    %560 = vmatpush.bf16.msra.mxu0 %v545
    %561 = vmatpush.bf16.msra.mxu0 %v544
    %562 = vmatpush.bf16.msra.mxu0 %v543
    %563 = vmatpush.bf16.msra.mxu0 %v542
    %564 = vmatpush.bf16.msra.mxu0 %v541
    %565 = vmatmul.bf16.gmra.mxu0 %v481
    %v566 = vpop.f32.mrf.mxu0
    %v567 = vadd.f32 %v507, %v566
    %v568 = vpop.f32.mrf.mxu0
    %v569 = vadd.f32 %v507, %v568
    %570 = vmatmul.bf16.gmra.mxu0 %v482
    %v571 = vpop.f32.mrf.mxu0
    %v572 = vadd.f32 %v507, %v571
    %v573 = vpop.f32.mrf.mxu0
    %v574 = vadd.f32 %v507, %v573
    %575 = vmatmul.bf16.gmra.mxu0 %v483
    %v576 = vpop.f32.mrf.mxu0
    %v577 = vadd.f32 %v507, %v576
    %v578 = vpop.f32.mrf.mxu0
    %v579 = vadd.f32 %v507, %v578
    %580 = vmatmul.bf16.gmra.mxu0 %v484
    %v581 = vpop.f32.mrf.mxu0
    %v582 = vadd.f32 %v507, %v581
    %v583 = vpop.f32.mrf.mxu0
    %v584 = vadd.f32 %v507, %v583
    %585 = vmatmul.bf16.gmra.mxu0 %v485
    %v586 = vpop.f32.mrf.mxu0
    %v587 = vadd.f32 %v507, %v586
    %v588 = vpop.f32.mrf.mxu0
    %v589 = vadd.f32 %v507, %v588
    %590 = vmatmul.bf16.gmra.mxu0 %v486
    %v591 = vpop.f32.mrf.mxu0
    %v592 = vadd.f32 %v507, %v591
    %v593 = vpop.f32.mrf.mxu0
    %v594 = vadd.f32 %v507, %v593
    %595 = vmatmul.bf16.gmra.mxu0 %v487
    %v596 = vpop.f32.mrf.mxu0
    %v597 = vadd.f32 %v507, %v596
    %v598 = vpop.f32.mrf.mxu0
    %v599 = vadd.f32 %v507, %v598
    %600 = vmatmul.bf16.gmra.mxu0 %v488
    %v601 = vpop.f32.mrf.mxu0
    %v602 = vadd.f32 %v507, %v601
    %v603 = vpop.f32.mrf.mxu0
    %v604 = vadd.f32 %v507, %v603
    %605 = vdwg.mxu0
    %v606 = vmax.f32 %v567, 0.0
    %v607 = vmax.f32 %v569, 0.0
    %v608 = vmax.f32 %v572, 0.0
    %v609 = vmax.f32 %v574, 0.0
    %v610 = vmax.f32 %v577, 0.0
    %v611 = vmax.f32 %v579, 0.0
    %v612 = vmax.f32 %v582, 0.0
    %v613 = vmax.f32 %v584, 0.0
    %v614 = vmax.f32 %v587, 0.0
    %v615 = vmax.f32 %v589, 0.0
    %v616 = vmax.f32 %v592, 0.0
    %v617 = vmax.f32 %v594, 0.0
    %v618 = vmax.f32 %v597, 0.0
    %v619 = vmax.f32 %v599, 0.0
    %v620 = vmax.f32 %v602, 0.0
    %v621 = vmax.f32 %v604, 0.0
    %v622 = vpack.c.bf16 %v606, %v606
    %v623 = vpack.c.bf16 %v607, %v607
    %v624 = vpack.c.bf16 %v608, %v608
    %v625 = vpack.c.bf16 %v609, %v609
    %v626 = vpack.c.bf16 %v610, %v610
    %v627 = vpack.c.bf16 %v611, %v611
    %v628 = vpack.c.bf16 %v612, %v612
    %v629 = vpack.c.bf16 %v613, %v613
    %v630 = vpack.c.bf16 %v614, %v614
    %v631 = vpack.c.bf16 %v615, %v615
    %v632 = vpack.c.bf16 %v616, %v616
    %v633 = vpack.c.bf16 %v617, %v617
    %v634 = vpack.c.bf16 %v618, %v618
    %v635 = vpack.c.bf16 %v619, %v619
    %v636 = vpack.c.bf16 %v620, %v620
    %v637 = vpack.c.bf16 %v621, %v621
    %638 = vst [vmem:[%s6] sm:$0xf] %v622
    %639 = vst [vmem:[%s6 + $0x4] sm:$0xf] %v623
    %640 = vst [vmem:[%s6 + $0x8] sm:$0xf] %v624
    %641 = vst [vmem:[%s6 + $0xc] sm:$0xf] %v625
    %642 = vst [vmem:[%s6 + $0x10] sm:$0xf] %v626
    %643 = vst [vmem:[%s6 + $0x14] sm:$0xf] %v627
    %644 = vst [vmem:[%s6 + $0x18] sm:$0xf] %v628
    %645 = vst [vmem:[%s6 + $0x1c] sm:$0xf] %v629
    %646 = vst [vmem:[%s6 + $0x20] sm:$0xf] %v630
    %647 = vst [vmem:[%s6 + $0x24] sm:$0xf] %v631
    %648 = vst [vmem:[%s6 + $0x28] sm:$0xf] %v632
    %649 = vst [vmem:[%s6 + $0x2c] sm:$0xf] %v633
    %650 = vst [vmem:[%s6 + $0x30] sm:$0xf] %v634
    %651 = vst [vmem:[%s6 + $0x34] sm:$0xf] %v635
    %652 = vst [vmem:[%s6 + $0x38] sm:$0xf] %v636
    %653 = vst [vmem:[%s6 + $0x3c] sm:$0xf] %v637
  $region37: #{gin_forward.3} parent=0 // pred_fallthru
    _
  // Predicated region
  $region38: #{gin_forward.3} parent=0 // pred_check
    _
  $region39: #{gin_forward.3} parent=0 // pred_check_branch
    %655 = sbr.rel (0) target = $region41
  $region40: #{gin_forward.3} parent=0 // pred_region
    _
  $region41: #{gin_forward.3} parent=0 // pred_fallthru
    _
  // Predicated region
  $region42: #{gin_forward.3} parent=0 // pred_check
    _
  $region43: #{gin_forward.3} parent=0 // pred_check_branch
    %657 = sbr.rel (0) target = $region45
  $region44: #{gin_forward.3} parent=0 // pred_region
    _
  $region45: #{gin_forward.3} parent=0 // pred_fallthru
    _

</llo_original>
